<compile_context>
chip_gen: v7x
topology: tpu7x:2x2x1
jax: 0.10.0
libtpu: 0.0.40
codegen_flags: <defaults>
</compile_context>

<pallas_src>
import jax
import jax.numpy as jnp
from jax import lax
from jax.experimental import pallas as pl
from jax.experimental.pallas import tpu as pltpu


def _round_up(x, m):
    return ((x + m - 1) // m) * m


def _make_critic_kernel(fuse_w2, H1, compute_dtype):
    def kernel(obs_ref, act_ref, w1o_ref, w1a_ref, b1_ref,
               w2_ref, b2_ref, w3t_ref, b3_ref, q_ref):
        # obs_ref: (tb, mtobs_dim)   act_ref: (tb, action_dim)
        # w1o_ref: (mtobs_dim, 2H1)  w1a_ref: (action_dim, 2H1)  b1_ref: (1, 2H1)
        # w2_ref:  (2H1, 2H2) block-diag  OR  (2, H1, H2) per-head     b2_ref: (1, 2H2)
        # w3t_ref: (2, 2H2) pre-transposed, block-structured           b3_ref: (2, 1)
        # q_ref:   (2, tb)  -> row 0 = q1, row 1 = q2  (lane-dense)
        obs = obs_ref[...].astype(compute_dtype)      # in-kernel cast (free VPU slot)
        act = act_ref[...].astype(compute_dtype)

        # Layer 1: split (obs | action) partial matmuls, both heads on 2*H1 lanes.
        h1 = jnp.dot(obs, w1o_ref[...], preferred_element_type=jnp.float32)
        h1 = h1 + jnp.dot(act, w1a_ref[...], preferred_element_type=jnp.float32)
        h1 = jnp.maximum(h1 + b1_ref[...], 0.0)        # ReLU (both heads)
        h1c = h1.astype(compute_dtype)

        # Layer 2: block-diag single matmul for small H, per-head dots for H >= 128.
        if fuse_w2:
            h2 = jnp.dot(h1c, w2_ref[...], preferred_element_type=jnp.float32)
        else:
            h2a = jnp.dot(h1c[:, :H1], w2_ref[0], preferred_element_type=jnp.float32)
            h2b = jnp.dot(h1c[:, H1:], w2_ref[1], preferred_element_type=jnp.float32)
            h2 = jnp.concatenate([h2a, h2b], axis=-1)
        h2 = jnp.maximum(h2 + b2_ref[...], 0.0)        # ReLU (both heads)
        h2c = h2.astype(compute_dtype)

        # Layer 3: lane-dense (2, tb) result — contract w3t axis 1 with h2 axis 1.
        q = lax.dot_general(w3t_ref[...], h2c,
                            dimension_numbers=(((1,), (1,)), ((), ())),
                            preferred_element_type=jnp.float32)
        q_ref[...] = (q + b3_ref[...]).astype(q_ref.dtype)

    return kernel


def pack_critic_params(params, mtobs_dim, compute_dtype=jnp.float32,
                       w2_fuse_max_hidden=128):
    """Pack per-head stacked params (2, in, out) into the fused kernel layout.

    Weights are stored in `compute_dtype` (jnp.bfloat16 recommended on v5e/v6e/v7x:
    single-pass MXU, half the weight DMA bytes; accumulation stays f32 in-kernel).
    Biases stay f32.  W2 is block-diagonally fused only below `w2_fuse_max_hidden`.
    """
    w1, b1, w2, b2, w3, b3 = params
    H1 = int(w1.shape[2])
    H2 = int(w2.shape[2])
    fuse_w2 = max(H1, H2) < w2_fuse_max_hidden

    # Layer 1: split along (obs | action) input rows, fuse heads on output lanes.
    w1_obs = jnp.concatenate([w1[0, :mtobs_dim], w1[1, :mtobs_dim]], axis=-1)  # (mtobs_dim, 2H1)
    w1_act = jnp.concatenate([w1[0, mtobs_dim:], w1[1, mtobs_dim:]], axis=-1)  # (action_dim, 2H1)
    b1_f = jnp.concatenate([b1[0], b1[1]], axis=-1)                            # (1, 2H1)

    # Layer 2: block-diag fusion only while the zero-padding waste is noise.
    if fuse_w2:
        z2 = jnp.zeros((H1, H2), w2.dtype)
        w2_f = jnp.concatenate(
            [jnp.concatenate([w2[0], z2], axis=-1),
             jnp.concatenate([z2, w2[1]], axis=-1)], axis=0)                   # (2H1, 2H2)
    else:
        w2_f = w2                                                              # (2, H1, H2)
    b2_f = jnp.concatenate([b2[0], b2[1]], axis=-1)                            # (1, 2H2)

    # Layer 3: pre-transposed (2, 2H2) so the kernel emits a lane-dense (2, tb) slab.
    z3 = jnp.zeros((1, H2), w3.dtype)
    w3t_f = jnp.concatenate(
        [jnp.concatenate([w3[0].T, z3], axis=-1),
         jnp.concatenate([z3, w3[1].T], axis=-1)], axis=0)                     # (2, 2H2)
    b3_f = jnp.concatenate([b3[0], b3[1]], axis=0)                             # (2, 1)

    tensors = (w1_obs.astype(compute_dtype), w1_act.astype(compute_dtype),
               b1_f.astype(jnp.float32),
               w2_f.astype(compute_dtype), b2_f.astype(jnp.float32),
               w3t_f.astype(compute_dtype), b3_f.astype(jnp.float32))
    return {"tensors": tensors, "fuse_w2": fuse_w2, "H1": H1, "H2": H2,
            "compute_dtype": compute_dtype}


def _choose_batch_tile(B, batch_tile):
    """Single step for small B; >=2 balanced, 128-aligned tiles for large B.

    >=2 steps lets v7x's two TensorCores split the "parallel" grid axis; the
    extra ~0.35 us step overhead is negligible on 1-TC chips (v5e/v6e).  VMEM is
    never the limiter here, so the cap only bounds the per-step input DMA.
    """
    if B <= 1024:
        return B
    n_steps = max(2, pl.cdiv(B, batch_tile))
    if n_steps % 2:
        n_steps += 1
    return _round_up(pl.cdiv(B, n_steps), 128)


def critic_forward(mtobss, action, packed, *, batch_tile=4096):
    """Returns (q1, q2), each (B, 1) float32, matching Critic.forward."""
    w1o, w1a, b1, w2, b2, w3t, b3 = packed["tensors"]
    fuse_w2 = packed["fuse_w2"]
    H1 = packed["H1"]
    compute_dtype = packed["compute_dtype"]

    B, mtobs_dim = mtobss.shape
    action_dim = action.shape[1]
    H1x2 = w1o.shape[1]
    H2x2 = b2.shape[1]

    # TODO(synk): if the replay buffer can store a pre-concatenated (obs|action)
    # array, a single-input W1 would halve the input DMA descriptors per step.

    tb = _choose_batch_tile(B, batch_tile)
    grid = (pl.cdiv(B, tb),)

    flops = 2 * B * ((mtobs_dim + action_dim) * H1x2
                     + (H1x2 * H2x2 if fuse_w2 else H1 * H2x2)
                     + H2x2 * 2)
    bytes_accessed = int(
        mtobss.size * mtobss.dtype.itemsize + action.size * action.dtype.itemsize
        + sum(int(p.size) * p.dtype.itemsize for p in packed["tensors"])
        + B * 2 * 4)

    kernel = _make_critic_kernel(fuse_w2, H1, compute_dtype)
    w2_spec = (pl.BlockSpec(w2.shape, lambda i: (0, 0, 0)) if w2.ndim == 3
               else pl.BlockSpec(w2.shape, lambda i: (0, 0)))

    q = pl.pallas_call(
        kernel,
        out_shape=jax.ShapeDtypeStruct((2, B), jnp.float32),
        grid_spec=pltpu.PrefetchScalarGridSpec(
            num_scalar_prefetch=0,
            grid=grid,
            in_specs=[
                pl.BlockSpec((tb, mtobs_dim), lambda i: (i, 0)),   # obs batch tile
                pl.BlockSpec((tb, action_dim), lambda i: (i, 0)),  # action batch tile
                pl.BlockSpec(w1o.shape, lambda i: (0, 0)),         # W1_obs (resident)
                pl.BlockSpec(w1a.shape, lambda i: (0, 0)),         # W1_act (resident)
                pl.BlockSpec(b1.shape, lambda i: (0, 0)),          # b1
                w2_spec,                                           # W2 (fused or per-head)
                pl.BlockSpec(b2.shape, lambda i: (0, 0)),          # b2
                pl.BlockSpec(w3t.shape, lambda i: (0, 0)),         # W3^T (both heads)
                pl.BlockSpec(b3.shape, lambda i: (0, 0)),          # b3
            ],
            out_specs=pl.BlockSpec((2, tb), lambda i: (0, i)),     # lane-dense (2, tb)
        ),
        compiler_params=pltpu.CompilerParams(
            dimension_semantics=("parallel",),   # batch tiles independent (v7x: 2 TCs)
        ),
        cost_estimate=pl.CostEstimate(
            flops=flops, transcendentals=0, bytes_accessed=bytes_accessed),
    )(mtobss, action, w1o, w1a, b1, w2, b2, w3t, b3)

    return q[0][:, None], q[1][:, None]


def init_critic_params(key, in_dim, hidden_dims, out_dim=1):
    """Deterministic synthetic init (stands in for weights_init); stacks both Q-heads."""
    dims = [in_dim] + list(hidden_dims) + [out_dim]
    ws, bs = [], []
    for i in range(len(dims) - 1):
        fan_in, fan_out = dims[i], dims[i + 1]
        key, k1, k2 = jax.random.split(key, 3)
        scale = jnp.sqrt(2.0 / (fan_in + fan_out))  # xavier-ish
        ws.append(jax.random.normal(k1, (2, fan_in, fan_out), jnp.float32) * scale)
        bs.append(jax.random.normal(k2, (2, 1, fan_out), jnp.float32) * 0.01)
    w1, w2, w3 = ws
    b1, b2, b3 = bs
    return (w1, b1, w2, b2, w3, b3)


def _reference_forward(mtobss, action, params):
    """Pure-JAX reference of the same two MLPs for a numerical sanity check."""
    x = jnp.concatenate([mtobss, action], axis=-1)
    w1, b1, w2, b2, w3, b3 = params
    outs = []
    for h in range(2):
        t = jnp.maximum(x @ w1[h] + b1[h], 0.0)
        t = jnp.maximum(t @ w2[h] + b2[h], 0.0)
        outs.append(t @ w3[h] + b3[h])
    return outs[0], outs[1]


if __name__ == "__main__":
    # Small config consistent with the module:
    batch = 8
    state_dim = 12
    num_tasks = 4
    mtobs_dim = state_dim + num_tasks      # 16
    action_dim = 8
    hidden_dims = [32, 32]                 # critic_cfg['critic_hidden_dim']
    in_dim = mtobs_dim + action_dim        # 24

    key = jax.random.PRNGKey(0)
    k_obs, k_act, k_par = jax.random.split(key, 3)
    mtobss = jax.random.normal(k_obs, (batch, mtobs_dim), jnp.float32)
    action = jax.random.normal(k_act, (batch, action_dim), jnp.float32)

    params = init_critic_params(k_par, in_dim, hidden_dims, out_dim=1)
    packed_f32 = pack_critic_params(params, mtobs_dim, compute_dtype=jnp.float32)

    # 1) Small batch, f32, fused block-diagonal W2: strict numerical check.
    q1, q2 = critic_forward(mtobss, action, packed_f32)
    q1 = jax.block_until_ready(q1)
    q2 = jax.block_until_ready(q2)
    r1, r2 = _reference_forward(mtobss, action, params)
    assert q1.shape == (batch, 1) and q2.shape == (batch, 1)
    assert jnp.allclose(q1, r1, atol=1e-5, rtol=1e-5)
    assert jnp.allclose(q2, r2, atol=1e-5, rtol=1e-5)

    # 2) Large batch, f32: exercises the >=2-step, 128-aligned batch tiling that
    #    lets v7x's two TensorCores split the grid (harmless on v5e/v6e).
    big_B = 2048
    kb1, kb2 = jax.random.split(jax.random.PRNGKey(1))
    big_obs = jax.random.normal(kb1, (big_B, mtobs_dim), jnp.float32)
    big_act = jax.random.normal(kb2, (big_B, action_dim), jnp.float32)
    Q1, Q2 = critic_forward(big_obs, big_act, packed_f32)
    Q1 = jax.block_until_ready(Q1)
    Q2 = jax.block_until_ready(Q2)
    R1, R2 = _reference_forward(big_obs, big_act, params)
    assert Q1.shape == (big_B, 1) and Q2.shape == (big_B, 1)
    assert jnp.allclose(Q1, R1, atol=1e-4, rtol=1e-4)
    assert jnp.allclose(Q2, R2, atol=1e-4, rtol=1e-4)

    # 3) Wide hidden (>=128) + bf16 MXU operands: exercises the split-W2 path and
    #    the in-kernel bf16 casts (bf16 is loose-precision by design, so only
    #    check shape/finiteness here; the f32 paths above verify the math).
    wide_params = init_critic_params(jax.random.PRNGKey(2), in_dim, [128, 128], out_dim=1)
    packed_bf16 = pack_critic_params(wide_params, mtobs_dim, compute_dtype=jnp.bfloat16)
    wq1, wq2 = critic_forward(mtobss, action, packed_bf16)
    wq1 = jax.block_until_ready(wq1)
    wq2 = jax.block_until_ready(wq2)
    assert wq1.shape == (batch, 1) and wq2.shape == (batch, 1)
    assert bool(jnp.all(jnp.isfinite(wq1))) and bool(jnp.all(jnp.isfinite(wq2)))

    # TODO(synk): cal_loss / weights_init are training utilities, not part of forward().
    print("KERNEL_OK")
</pallas_src>

<mosaic_0001>
module attributes {stable_mosaic.version = 11 : i64} {
  func.func @kernel(%arg0: i32, %arg1: memref<8x16xf32, #tpu.memory_space<vmem>>, %arg2: memref<8x8xf32, #tpu.memory_space<vmem>>, %arg3: memref<16x64xf32, #tpu.memory_space<vmem>>, %arg4: memref<8x64xf32, #tpu.memory_space<vmem>>, %arg5: memref<1x64xf32, #tpu.memory_space<vmem>>, %arg6: memref<64x64xf32, #tpu.memory_space<vmem>>, %arg7: memref<1x64xf32, #tpu.memory_space<vmem>>, %arg8: memref<2x64xf32, #tpu.memory_space<vmem>>, %arg9: memref<2x1xf32, #tpu.memory_space<vmem>>, %arg10: memref<2x8xf32, #tpu.memory_space<vmem>>) attributes {dimension_semantics = [#tpu.dimension_semantics<parallel>], iteration_bounds = array<i64: 1>, scalar_prefetch = 0 : i64, scratch_operands = 0 : i64, tpu.core_type = #tpu.core_type<tc>, window_params = [{transform_indices = @transform_0, window_bounds = array<i64: 8, 16>}, {transform_indices = @transform_1, window_bounds = array<i64: 8, 8>}, {pipeline_mode = #tpu.pipeline_mode<synchronous>, transform_indices = @transform_2, window_bounds = array<i64: 16, 64>}, {pipeline_mode = #tpu.pipeline_mode<synchronous>, transform_indices = @transform_3, window_bounds = array<i64: 8, 64>}, {pipeline_mode = #tpu.pipeline_mode<synchronous>, transform_indices = @transform_4, window_bounds = array<i64: 1, 64>}, {pipeline_mode = #tpu.pipeline_mode<synchronous>, transform_indices = @transform_5, window_bounds = array<i64: 64, 64>}, {pipeline_mode = #tpu.pipeline_mode<synchronous>, transform_indices = @transform_6, window_bounds = array<i64: 1, 64>}, {pipeline_mode = #tpu.pipeline_mode<synchronous>, transform_indices = @transform_7, window_bounds = array<i64: 2, 64>}, {pipeline_mode = #tpu.pipeline_mode<synchronous>, transform_indices = @transform_8, window_bounds = array<i64: 2, 1>}, {transform_indices = @transform_9, window_bounds = array<i64: 2, 8>}]} {
    %c0 = arith.constant 0 : index
    %c0_0 = arith.constant 0 : index
    %0 = vector.load %arg1[%c0, %c0_0] : memref<8x16xf32, #tpu.memory_space<vmem>>, vector<8x16xf32>
    %c0_1 = arith.constant 0 : index
    %c0_2 = arith.constant 0 : index
    %1 = vector.load %arg2[%c0_1, %c0_2] : memref<8x8xf32, #tpu.memory_space<vmem>>, vector<8x8xf32>
    %c0_3 = arith.constant 0 : index
    %c0_4 = arith.constant 0 : index
    %2 = vector.load %arg3[%c0_3, %c0_4] : memref<16x64xf32, #tpu.memory_space<vmem>>, vector<16x64xf32>
    %cst = arith.constant dense<0.000000e+00> : vector<8x64xf32>
    %3 = tpu.matmul %0, %2, %cst {dimension_numbers = #tpu.dot_dimension_numbers<[1], [0], [0], [1], [0, 0, 1, 1], [], []>} : vector<8x16xf32>, vector<16x64xf32>, vector<8x64xf32> -> vector<8x64xf32>
    %c0_5 = arith.constant 0 : index
    %c0_6 = arith.constant 0 : index
    %4 = vector.load %arg4[%c0_5, %c0_6] : memref<8x64xf32, #tpu.memory_space<vmem>>, vector<8x64xf32>
    %cst_7 = arith.constant dense<0.000000e+00> : vector<8x64xf32>
    %5 = tpu.matmul %1, %4, %cst_7 {dimension_numbers = #tpu.dot_dimension_numbers<[1], [0], [0], [1], [0, 0, 1, 1], [], []>} : vector<8x8xf32>, vector<8x64xf32>, vector<8x64xf32> -> vector<8x64xf32>
    %6 = arith.addf %3, %5 : vector<8x64xf32>
    %c0_8 = arith.constant 0 : index
    %c0_9 = arith.constant 0 : index
    %7 = vector.load %arg5[%c0_8, %c0_9] : memref<1x64xf32, #tpu.memory_space<vmem>>, vector<1x64xf32>
    %8 = vector.broadcast %7 : vector<1x64xf32> to vector<8x64xf32>
    %9 = arith.addf %6, %8 : vector<8x64xf32>
    %cst_10 = arith.constant 0.000000e+00 : f32
    %10 = vector.broadcast %cst_10 : f32 to vector<8x64xf32>
    %11 = arith.maximumf %9, %10 : vector<8x64xf32>
    %c0_11 = arith.constant 0 : index
    %c0_12 = arith.constant 0 : index
    %12 = vector.load %arg6[%c0_11, %c0_12] : memref<64x64xf32, #tpu.memory_space<vmem>>, vector<64x64xf32>
    %cst_13 = arith.constant dense<0.000000e+00> : vector<8x64xf32>
    %13 = tpu.matmul %11, %12, %cst_13 {dimension_numbers = #tpu.dot_dimension_numbers<[1], [0], [0], [1], [0, 0, 1, 1], [], []>} : vector<8x64xf32>, vector<64x64xf32>, vector<8x64xf32> -> vector<8x64xf32>
    %c0_14 = arith.constant 0 : index
    %c0_15 = arith.constant 0 : index
    %14 = vector.load %arg7[%c0_14, %c0_15] : memref<1x64xf32, #tpu.memory_space<vmem>>, vector<1x64xf32>
    %15 = vector.broadcast %14 : vector<1x64xf32> to vector<8x64xf32>
    %16 = arith.addf %13, %15 : vector<8x64xf32>
    %cst_16 = arith.constant 0.000000e+00 : f32
    %17 = vector.broadcast %cst_16 : f32 to vector<8x64xf32>
    %18 = arith.maximumf %16, %17 : vector<8x64xf32>
    %c0_17 = arith.constant 0 : index
    %c0_18 = arith.constant 0 : index
    %19 = vector.load %arg8[%c0_17, %c0_18] : memref<2x64xf32, #tpu.memory_space<vmem>>, vector<2x64xf32>
    %cst_19 = arith.constant dense<0.000000e+00> : vector<2x8xf32>
    %20 = tpu.matmul %19, %18, %cst_19 {dimension_numbers = #tpu.dot_dimension_numbers<[1], [1], [0], [0], [0, 0, 1, 0], [], []>} : vector<2x64xf32>, vector<8x64xf32>, vector<2x8xf32> -> vector<2x8xf32>
    %c0_20 = arith.constant 0 : index
    %c0_21 = arith.constant 0 : index
    %21 = vector.load %arg9[%c0_20, %c0_21] : memref<2x1xf32, #tpu.memory_space<vmem>>, vector<2x1xf32>
    %22 = vector.broadcast %21 : vector<2x1xf32> to vector<2x8xf32>
    %23 = arith.addf %20, %22 : vector<2x8xf32>
    %c0_22 = arith.constant 0 : index
    %c0_23 = arith.constant 0 : index
    %24 = vector.load %arg10[%c0_22, %c0_23] : memref<2x8xf32, #tpu.memory_space<vmem>>, vector<2x8xf32>
    tpu.vector_store %arg10[%c0_22, %c0_23], %23 {strides = array<i32>} : memref<2x8xf32, #tpu.memory_space<vmem>>, vector<2x8xf32>,
    return
  }
  func.func @transform_0(%arg0: i32) -> (i32, i32) {
    %c0_i32 = arith.constant 0 : i32
    %c0_i32_0 = arith.constant 0 : i32
    return %arg0, %c0_i32 : i32, i32
  }
  func.func @transform_1(%arg0: i32) -> (i32, i32) {
    %c0_i32 = arith.constant 0 : i32
    %c0_i32_0 = arith.constant 0 : i32
    return %arg0, %c0_i32 : i32, i32
  }
  func.func @transform_2(%arg0: i32) -> (i32, i32) {
    %c0_i32 = arith.constant 0 : i32
    %c0_i32_0 = arith.constant 0 : i32
    %c0_i32_1 = arith.constant 0 : i32
    return %c0_i32, %c0_i32_0 : i32, i32
  }
  func.func @transform_3(%arg0: i32) -> (i32, i32) {
    %c0_i32 = arith.constant 0 : i32
    %c0_i32_0 = arith.constant 0 : i32
    %c0_i32_1 = arith.constant 0 : i32
    return %c0_i32, %c0_i32_0 : i32, i32
  }
  func.func @transform_4(%arg0: i32) -> (i32, i32) {
    %c0_i32 = arith.constant 0 : i32
    %c0_i32_0 = arith.constant 0 : i32
    %c0_i32_1 = arith.constant 0 : i32
    return %c0_i32, %c0_i32_0 : i32, i32
  }
  func.func @transform_5(%arg0: i32) -> (i32, i32) {
    %c0_i32 = arith.constant 0 : i32
    %c0_i32_0 = arith.constant 0 : i32
    %c0_i32_1 = arith.constant 0 : i32
    return %c0_i32, %c0_i32_0 : i32, i32
  }
  func.func @transform_6(%arg0: i32) -> (i32, i32) {
    %c0_i32 = arith.constant 0 : i32
    %c0_i32_0 = arith.constant 0 : i32
    %c0_i32_1 = arith.constant 0 : i32
    return %c0_i32, %c0_i32_0 : i32, i32
  }
  func.func @transform_7(%arg0: i32) -> (i32, i32) {
    %c0_i32 = arith.constant 0 : i32
    %c0_i32_0 = arith.constant 0 : i32
    %c0_i32_1 = arith.constant 0 : i32
    return %c0_i32, %c0_i32_0 : i32, i32
  }
  func.func @transform_8(%arg0: i32) -> (i32, i32) {
    %c0_i32 = arith.constant 0 : i32
    %c0_i32_0 = arith.constant 0 : i32
    %c0_i32_1 = arith.constant 0 : i32
    return %c0_i32, %c0_i32_0 : i32, i32
  }
  func.func @transform_9(%arg0: i32) -> (i32, i32) {
    %c0_i32 = arith.constant 0 : i32
    %c0_i32_0 = arith.constant 0 : i32
    return %c0_i32, %arg0 : i32, i32
  }
}

</mosaic_0001>

<llo_original>
// kernel: tpu_custom_call.1
$region0: #{tpu_custom_call.1}
  #allocation0 [shape = 'u32[]', space=smem, size = 0x4, offset = 0x4, fixed_abs, tag = 'smem constant byte address 0x4 - core index']
  #allocation1 [shape = 'u32[144,128]{1,0:T(1,128)}', space=vmem, size = 0x12000, scoped, tag = 'internal scratch']
  %s0 = inlined_call_operand.hbm [shape: f32[8,16], index: 0, kind: input, shape index: {}]
  %s1 = inlined_call_operand.hbm [shape: f32[8,8], index: 1, kind: input, shape index: {}]
  %s2 = inlined_call_operand.hbm [shape: f32[16,64], index: 2, kind: input, shape index: {}]
  %s3 = inlined_call_operand.vmem [shape: f32[8,64], index: 3, kind: input, shape index: {}]
  %s4 = inlined_call_operand.vmem [shape: f32[1,64], index: 4, kind: input, shape index: {}]
  %s5 = inlined_call_operand.hbm [shape: f32[64,64], index: 5, kind: input, shape index: {}]
  %s6 = inlined_call_operand.vmem [shape: f32[1,64], index: 6, kind: input, shape index: {}]
  %s7 = inlined_call_operand.vmem [shape: f32[2,64], index: 7, kind: input, shape index: {}]
  %s8 = inlined_call_operand.vmem [shape: f32[2,1], index: 8, kind: input, shape index: {}]
  %s9 = inlined_call_operand.hbm [shape: f32[2,8], index: 9, kind: output, shape index: {}]
  %s10 = sld [smem:[#allocation0]]
  $region62: #{tpu_custom_call.1} parent=0
    _
  %s12 = ssub.s32 1, %s10
  %s13 = scalar_select 0, %s12, %s10
  $region1: #{tpu_custom_call.1} parent=0
    #allocation2 [shape = 'u8[4096]{0}', space=vmem, size = 0x1000, scoped, tag = 'input window, operand 0, single buffered']
    #allocation3 [shape = 's32[1]{0}', space=sflag, size = 0x4, scoped, tag = 'scoped memory for tpu_custom_call.1']
    #allocation4 [shape = 's32[1]{0}', space=sflag, size = 0x4, scoped, tag = 'scoped memory for tpu_custom_call.1']
    #allocation5 [shape = 'u8[4096]{0}', space=vmem, size = 0x1000, scoped, tag = 'input window, operand 1, single buffered']
    #allocation6 [shape = 's32[1]{0}', space=sflag, size = 0x4, scoped, tag = 'scoped memory for tpu_custom_call.1']
    #allocation7 [shape = 'u8[8192]{0}', space=vmem, size = 0x2000, scoped, tag = 'input window, operand 2, single buffered']
    #allocation8 [shape = 'u8[32768]{0}', space=vmem, size = 0x8000, scoped, tag = 'input window, operand 5, single buffered']
    #allocation9 [shape = 's32[1]{0}', space=sflag, size = 0x4, scoped, tag = 'scoped memory for tpu_custom_call.1']
    #allocation10 [shape = 'u8[1024]{0}', space=vmem, size = 0x400, scoped, tag = 'output window, operand 0, single buffered']
    %14 = vsyncpa [#allocation3], 0
    %15 = vsyncpa [#allocation6], 0
    %16 = vsyncpa [#allocation9], 0
    %17 = vsyncpa [#allocation4], 0
    // Predicated region
    $region2: #{tpu_custom_call.1} parent=1 // pred_check
      _
    $region3: #{tpu_custom_call.1} parent=1 // pred_check_branch
      %19 = sbr.rel (0) target = $region5
    $region4: #{tpu_custom_call.1} parent=1 // pred_region
      %s21 = ssub.s32 128, 128
      %22 = vsyncadd [#allocation3], %s21
      %s24 = sshll.u32 [#allocation2], 4
      %s25 = int_to_ptr.vmem [resolvable:$true] %s24
      %27 = dma.hbm_to_vmem [thread:$0]  %s0, 128, %s25, [#allocation3]
    $region5: #{tpu_custom_call.1} parent=1 // pred_fallthru
      _
    // Predicated region
    $region6: #{tpu_custom_call.1} parent=1 // pred_check
      _
    $region7: #{tpu_custom_call.1} parent=1 // pred_check_branch
      %29 = sbr.rel (0) target = $region9
    $region8: #{tpu_custom_call.1} parent=1 // pred_region
      %s31 = ssub.s32 128, 128
      %32 = vsyncadd [#allocation6], %s31
      %s34 = sshll.u32 [#allocation5], 4
      %s35 = int_to_ptr.vmem [resolvable:$true] %s34
      %37 = dma.hbm_to_vmem [thread:$0]  %s1, 128, %s35, [#allocation6]
    $region9: #{tpu_custom_call.1} parent=1 // pred_fallthru
      _
    // Predicated region
    $region10: #{tpu_custom_call.1} parent=1 // pred_check
      _
    $region11: #{tpu_custom_call.1} parent=1 // pred_check_branch
      %39 = sbr.rel (0) target = $region13
    $region12: #{tpu_custom_call.1} parent=1 // pred_region
      %s41 = ssub.s32 256, 256
      %42 = vsyncadd [#allocation6], %s41
      %s43 = sshll.u32 [#allocation7], 4
      %s44 = int_to_ptr.vmem [resolvable:$true] %s43
      %49 = dma.hbm_to_vmem [thread:$0]  %s2, 256, %s44, [#allocation6], 128, 128, 8
    $region13: #{tpu_custom_call.1} parent=1 // pred_fallthru
      _
    // Predicated region
    $region14: #{tpu_custom_call.1} parent=1 // pred_check
      _
    $region15: #{tpu_custom_call.1} parent=1 // pred_check_branch
      %51 = sbr.rel (0) target = $region17
    $region16: #{tpu_custom_call.1} parent=1 // pred_region
      _
    $region17: #{tpu_custom_call.1} parent=1 // pred_fallthru
      _
    // Predicated region
    $region18: #{tpu_custom_call.1} parent=1 // pred_check
      _
    $region19: #{tpu_custom_call.1} parent=1 // pred_check_branch
      %53 = sbr.rel (0) target = $region21
    $region20: #{tpu_custom_call.1} parent=1 // pred_region
      _
    $region21: #{tpu_custom_call.1} parent=1 // pred_fallthru
      _
    // Predicated region
    $region22: #{tpu_custom_call.1} parent=1 // pred_check
      _
    $region23: #{tpu_custom_call.1} parent=1 // pred_check_branch
      %55 = sbr.rel (0) target = $region25
    $region24: #{tpu_custom_call.1} parent=1 // pred_region
      %s57 = ssub.s32 1024, 1024
      %58 = vsyncadd [#allocation9], %s57
      %s59 = sshll.u32 [#allocation8], 4
      %s60 = int_to_ptr.vmem [resolvable:$true] %s59
      %65 = dma.hbm_to_vmem [thread:$0]  %s5, 1024, %s60, [#allocation9], 128, 128, 8
    $region25: #{tpu_custom_call.1} parent=1 // pred_fallthru
      _
    // Predicated region
    $region26: #{tpu_custom_call.1} parent=1 // pred_check
      _
    $region27: #{tpu_custom_call.1} parent=1 // pred_check_branch
      %67 = sbr.rel (0) target = $region29
    $region28: #{tpu_custom_call.1} parent=1 // pred_region
      _
    $region29: #{tpu_custom_call.1} parent=1 // pred_fallthru
      _
    // Predicated region
    $region30: #{tpu_custom_call.1} parent=1 // pred_check
      _
    $region31: #{tpu_custom_call.1} parent=1 // pred_check_branch
      %69 = sbr.rel (0) target = $region33
    $region32: #{tpu_custom_call.1} parent=1 // pred_region
      _
    $region33: #{tpu_custom_call.1} parent=1 // pred_fallthru
      _
    // Predicated region
    $region34: #{tpu_custom_call.1} parent=1 // pred_check
      _
    $region35: #{tpu_custom_call.1} parent=1 // pred_check_branch
      %71 = sbr.rel (0) target = $region37
    $region36: #{tpu_custom_call.1} parent=1 // pred_region
      _
    $region37: #{tpu_custom_call.1} parent=1 // pred_fallthru
      _
    // Predicated region
    $region38: #{tpu_custom_call.1} parent=1 // pred_check
      _
    $region39: #{tpu_custom_call.1} parent=1 // pred_check_branch
      %73 = sbr.rel (0) target = $region41
    $region40: #{tpu_custom_call.1} parent=1 // pred_region
      %74 = dma.done [#allocation3], 128
    $region41: #{tpu_custom_call.1} parent=1 // pred_fallthru
      _
    // Predicated region
    $region42: #{tpu_custom_call.1} parent=1 // pred_check
      _
    $region43: #{tpu_custom_call.1} parent=1 // pred_check_branch
      %76 = sbr.rel (0) target = $region45
    $region44: #{tpu_custom_call.1} parent=1 // pred_region
      %77 = dma.done [#allocation6], 128
    $region45: #{tpu_custom_call.1} parent=1 // pred_fallthru
      _
    // Predicated region
    $region46: #{tpu_custom_call.1} parent=1 // pred_check
      _
    $region47: #{tpu_custom_call.1} parent=1 // pred_check_branch
      %79 = sbr.rel (0) target = $region49
    $region48: #{tpu_custom_call.1} parent=1 // pred_region
      %80 = dma.done [#allocation6], 256
    $region49: #{tpu_custom_call.1} parent=1 // pred_fallthru
      _
    // Predicated region
    $region50: #{tpu_custom_call.1} parent=1 // pred_check
      _
    $region51: #{tpu_custom_call.1} parent=1 // pred_check_branch
      %82 = sbr.rel (0) target = $region53
    $region52: #{tpu_custom_call.1} parent=1 // pred_region
      %83 = dma.done [#allocation9], 1024
    $region53: #{tpu_custom_call.1} parent=1 // pred_fallthru
      _
    %v84 = vld [vmem:[#allocation2] sm:$0xff]
    %v85 = vld [vmem:[#allocation5] sm:$0xff]
    %v86 = vld [vmem:[#allocation7] sm:$0xff]
    %v87 = vld [vmem:[#allocation7 + $0x8] sm:$0xff]
    %v88 = vld [vmem:[%s3] sm:$0xff]
    %vm89 = vcmask 64512
    %v91 = vsel %vm89, %v85, 0
    %93 = vmatprep.subr.mxu0 0.0
    %94 = vmatpush1.msra.mxu0 %v88
    %95 = vmatprep.subr.mxu0 0.0
    %96 = vmatpush1.msra.mxu0 0.0
    %97 = vmatprep.subr.mxu0 0.0
    %98 = vmatpush1.msra.mxu0 0.0
    %99 = vmatprep.subr.mxu0 0.0
    %100 = vmatpush1.msra.mxu0 0.0
    %101 = vmatprep.subr.mxu0 0.0
    %102 = vmatpush1.msra.mxu0 0.0
    %103 = vmatprep.subr.mxu0 0.0
    %104 = vmatpush1.msra.mxu0 0.0
    %105 = vmatprep.subr.mxu0 0.0
    %106 = vmatpush1.msra.mxu0 0.0
    %107 = vmatprep.subr.mxu0 0.0
    %108 = vmatpush1.msra.mxu0 0.0
    %109 = vmatprep.subr.mxu0 0.0
    %110 = vmatpush1.msra.mxu0 0.0
    %111 = vmatprep.subr.mxu0 0.0
    %112 = vmatpush1.msra.mxu0 0.0
    %113 = vmatprep.subr.mxu0 0.0
    %114 = vmatpush1.msra.mxu0 0.0
    %115 = vmatprep.subr.mxu0 0.0
    %116 = vmatpush1.msra.mxu0 0.0
    %117 = vmatprep.subr.mxu0 0.0
    %118 = vmatpush1.msra.mxu0 0.0
    %119 = vmatprep.subr.mxu0 0.0
    %120 = vmatpush1.msra.mxu0 0.0
    %121 = vmatprep.subr.mxu0 0.0
    %122 = vmatpush1.msra.mxu0 0.0
    %123 = vmatprep.subr.mxu0 0.0
    %124 = vmatpush1.msra.mxu0 0.0
    %125 = vmatprep.subr.mxu0 0.0
    %126 = vmatpush1.msra.mxu0 0.0
    %127 = vmatprep.subr.mxu0 0.0
    %128 = vmatpush1.msra.mxu0 0.0
    %129 = vmatprep.subr.mxu0 0.0
    %130 = vmatpush1.msra.mxu0 0.0
    %131 = vmatprep.subr.mxu0 0.0
    %132 = vmatpush1.msra.mxu0 0.0
    %133 = vmatprep.subr.mxu0 0.0
    %134 = vmatpush1.msra.mxu0 0.0
    %135 = vmatprep.subr.mxu0 0.0
    %136 = vmatpush1.msra.mxu0 0.0
    %137 = vmatprep.subr.mxu0 0.0
    %138 = vmatpush1.msra.mxu0 0.0
    %139 = vmatprep.subr.mxu0 0.0
    %140 = vmatpush1.msra.mxu0 0.0
    %141 = vmatprep.subr.mxu0 0.0
    %142 = vmatpush1.msra.mxu0 0.0
    %143 = vmatprep.subr.mxu0 0.0
    %144 = vmatpush1.msra.mxu0 0.0
    %145 = vmatprep.subr.mxu0 0.0
    %146 = vmatpush1.msra.mxu0 0.0
    %147 = vmatprep.subr.mxu0 0.0
    %148 = vmatpush1.msra.mxu0 0.0
    %149 = vmatprep.subr.mxu0 0.0
    %150 = vmatpush1.msra.mxu0 0.0
    %151 = vmatprep.subr.mxu0 0.0
    %152 = vmatpush1.msra.mxu0 0.0
    %153 = vmatprep.subr.mxu0 0.0
    %154 = vmatpush1.msra.mxu0 0.0
    %155 = vmatprep.subr.mxu0 0.0
    %156 = vmatpush1.msra.mxu0 0.0
    %157 = vmatprep.mubr.f32.mxu0 0.0
    %158 = vmatmul.mubr.f32.gmra.mrb[0].mxu0 %v91
    %v159 = vpop.f32.mrb[0].mxu0
    %v160 = vadd.f32 0.0, %v159
    %v161 = vpop.f32.mrb[0].mxu0
    %162 = vdwg.mxu0
    %vm163 = vcmask 130048
    %v165 = vsel %vm163, %v84, 0
    %167 = vmatprep.subr.mxu0 0.0
    %168 = vmatpush1.msra.mxu0 %v86
    %169 = vmatprep.subr.mxu0 0.0
    %170 = vmatpush1.msra.mxu0 %v87
    %171 = vmatprep.subr.mxu0 0.0
    %172 = vmatpush1.msra.mxu0 0.0
    %173 = vmatprep.subr.mxu0 0.0
    %174 = vmatpush1.msra.mxu0 0.0
    %175 = vmatprep.subr.mxu0 0.0
    %176 = vmatpush1.msra.mxu0 0.0
    %177 = vmatprep.subr.mxu0 0.0
    %178 = vmatpush1.msra.mxu0 0.0
    %179 = vmatprep.subr.mxu0 0.0
    %180 = vmatpush1.msra.mxu0 0.0
    %181 = vmatprep.subr.mxu0 0.0
    %182 = vmatpush1.msra.mxu0 0.0
    %183 = vmatprep.subr.mxu0 0.0
    %184 = vmatpush1.msra.mxu0 0.0
    %185 = vmatprep.subr.mxu0 0.0
    %186 = vmatpush1.msra.mxu0 0.0
    %187 = vmatprep.subr.mxu0 0.0
    %188 = vmatpush1.msra.mxu0 0.0
    %189 = vmatprep.subr.mxu0 0.0
    %190 = vmatpush1.msra.mxu0 0.0
    %191 = vmatprep.subr.mxu0 0.0
    %192 = vmatpush1.msra.mxu0 0.0
    %193 = vmatprep.subr.mxu0 0.0
    %194 = vmatpush1.msra.mxu0 0.0
    %195 = vmatprep.subr.mxu0 0.0
    %196 = vmatpush1.msra.mxu0 0.0
    %197 = vmatprep.subr.mxu0 0.0
    %198 = vmatpush1.msra.mxu0 0.0
    %199 = vmatprep.subr.mxu0 0.0
    %200 = vmatpush1.msra.mxu0 0.0
    %201 = vmatprep.subr.mxu0 0.0
    %202 = vmatpush1.msra.mxu0 0.0
    %203 = vmatprep.subr.mxu0 0.0
    %204 = vmatpush1.msra.mxu0 0.0
    %205 = vmatprep.subr.mxu0 0.0
    %206 = vmatpush1.msra.mxu0 0.0
    %207 = vmatprep.subr.mxu0 0.0
    %208 = vmatpush1.msra.mxu0 0.0
    %209 = vmatprep.subr.mxu0 0.0
    %210 = vmatpush1.msra.mxu0 0.0
    %211 = vmatprep.subr.mxu0 0.0
    %212 = vmatpush1.msra.mxu0 0.0
    %213 = vmatprep.subr.mxu0 0.0
    %214 = vmatpush1.msra.mxu0 0.0
    %215 = vmatprep.subr.mxu0 0.0
    %216 = vmatpush1.msra.mxu0 0.0
    %217 = vmatprep.subr.mxu0 0.0
    %218 = vmatpush1.msra.mxu0 0.0
    %219 = vmatprep.subr.mxu0 0.0
    %220 = vmatpush1.msra.mxu0 0.0
    %221 = vmatprep.subr.mxu0 0.0
    %222 = vmatpush1.msra.mxu0 0.0
    %223 = vmatprep.subr.mxu0 0.0
    %224 = vmatpush1.msra.mxu0 0.0
    %225 = vmatprep.subr.mxu0 0.0
    %226 = vmatpush1.msra.mxu0 0.0
    %227 = vmatprep.subr.mxu0 0.0
    %228 = vmatpush1.msra.mxu0 0.0
    %229 = vmatprep.subr.mxu0 0.0
    %230 = vmatpush1.msra.mxu0 0.0
    %231 = vmatprep.mubr.f32.mxu0 0.0
    %232 = vmatmul.mubr.f32.gmra.mrb[0].mxu0 %v165
    %v233 = vpop.f32.mrb[0].mxu0
    %v234 = vadd.f32 %v160, %v233
    %v235 = vpop.f32.mrb[0].mxu0
    %236 = vdwg.mxu0
    %v237 = vld [vmem:[%s4] sm:$0x1]
    %v239 = vlaneseq
    %v240 = vshrl.u32 %v239, 7
    %v241 = vsub.s32 0, %v240
    %v242 = vrot.slane %v237, %v241
    %v244 = vadd.f32 %v234, %v242
    %v245 = vmax.f32 %v244, 0.0
    %v246 = vld [vmem:[#allocation8] sm:$0xff]
    %v247 = vld [vmem:[#allocation8 + $0x8] sm:$0xff]
    %v248 = vld [vmem:[#allocation8 + $0x10] sm:$0xff]
    %v249 = vld [vmem:[#allocation8 + $0x18] sm:$0xff]
    %v250 = vld [vmem:[#allocation8 + $0x20] sm:$0xff]
    %v251 = vld [vmem:[#allocation8 + $0x28] sm:$0xff]
    %v252 = vld [vmem:[#allocation8 + $0x30] sm:$0xff]
    %v253 = vld [vmem:[#allocation8 + $0x38] sm:$0xff]
    %v254 = vld [vmem:[%s6] sm:$0x1]
    %v256 = vlaneseq
    %v257 = vshrl.u32 %v256, 7
    %v258 = vsub.s32 0, %v257
    %v259 = vrot.slane %v254, %v258
    %vm261 = vcmask 523264
    %v263 = vsel %vm261, %v245, 0
    %265 = vmatprep.subr.mxu0 0.0
    %266 = vmatpush1.msra.mxu0 %v246
    %267 = vmatprep.subr.mxu0 0.0
    %268 = vmatpush1.msra.mxu0 %v247
    %269 = vmatprep.subr.mxu0 0.0
    %270 = vmatpush1.msra.mxu0 %v248
    %271 = vmatprep.subr.mxu0 0.0
    %272 = vmatpush1.msra.mxu0 %v249
    %273 = vmatprep.subr.mxu0 0.0
    %274 = vmatpush1.msra.mxu0 %v250
    %275 = vmatprep.subr.mxu0 0.0
    %276 = vmatpush1.msra.mxu0 %v251
    %277 = vmatprep.subr.mxu0 0.0
    %278 = vmatpush1.msra.mxu0 %v252
    %279 = vmatprep.subr.mxu0 0.0
    %280 = vmatpush1.msra.mxu0 %v253
    %281 = vmatprep.subr.mxu0 0.0
    %282 = vmatpush1.msra.mxu0 0.0
    %283 = vmatprep.subr.mxu0 0.0
    %284 = vmatpush1.msra.mxu0 0.0
    %285 = vmatprep.subr.mxu0 0.0
    %286 = vmatpush1.msra.mxu0 0.0
    %287 = vmatprep.subr.mxu0 0.0
    %288 = vmatpush1.msra.mxu0 0.0
    %289 = vmatprep.subr.mxu0 0.0
    %290 = vmatpush1.msra.mxu0 0.0
    %291 = vmatprep.subr.mxu0 0.0
    %292 = vmatpush1.msra.mxu0 0.0
    %293 = vmatprep.subr.mxu0 0.0
    %294 = vmatpush1.msra.mxu0 0.0
    %295 = vmatprep.subr.mxu0 0.0
    %296 = vmatpush1.msra.mxu0 0.0
    %297 = vmatprep.subr.mxu0 0.0
    %298 = vmatpush1.msra.mxu0 0.0
    %299 = vmatprep.subr.mxu0 0.0
    %300 = vmatpush1.msra.mxu0 0.0
    %301 = vmatprep.subr.mxu0 0.0
    %302 = vmatpush1.msra.mxu0 0.0
    %303 = vmatprep.subr.mxu0 0.0
    %304 = vmatpush1.msra.mxu0 0.0
    %305 = vmatprep.subr.mxu0 0.0
    %306 = vmatpush1.msra.mxu0 0.0
    %307 = vmatprep.subr.mxu0 0.0
    %308 = vmatpush1.msra.mxu0 0.0
    %309 = vmatprep.subr.mxu0 0.0
    %310 = vmatpush1.msra.mxu0 0.0
    %311 = vmatprep.subr.mxu0 0.0
    %312 = vmatpush1.msra.mxu0 0.0
    %313 = vmatprep.subr.mxu0 0.0
    %314 = vmatpush1.msra.mxu0 0.0
    %315 = vmatprep.subr.mxu0 0.0
    %316 = vmatpush1.msra.mxu0 0.0
    %317 = vmatprep.subr.mxu0 0.0
    %318 = vmatpush1.msra.mxu0 0.0
    %319 = vmatprep.subr.mxu0 0.0
    %320 = vmatpush1.msra.mxu0 0.0
    %321 = vmatprep.subr.mxu0 0.0
    %322 = vmatpush1.msra.mxu0 0.0
    %323 = vmatprep.subr.mxu0 0.0
    %324 = vmatpush1.msra.mxu0 0.0
    %325 = vmatprep.subr.mxu0 0.0
    %326 = vmatpush1.msra.mxu0 0.0
    %327 = vmatprep.subr.mxu0 0.0
    %328 = vmatpush1.msra.mxu0 0.0
    %329 = vmatprep.mubr.f32.mxu0 0.0
    %330 = vmatmul.mubr.f32.gmra.mrb[0].mxu0 %v263
    %v331 = vpop.f32.mrb[0].mxu0
    %v332 = vadd.f32 %v259, %v331
    %v333 = vpop.f32.mrb[0].mxu0
    %334 = vdwg.mxu0
    %v335 = vmax.f32 %v332, 0.0
    %v336 = vld [vmem:[%s7] sm:$0x3]
    %v337 = vld [vmem:[%s8] sm:$0x3]
    %339 = vset.pattern.permute.xlu0 0
    %340 = vperm.xlu0 %339, %v337
    %v341 = vpop.permute.xlu0 %340
    %v344 = vsel %vm261, %v336, 0
    %v347 = vsel %vm261, %v335, 0
    %349 = vmatprep.subr.mxu0 0.0
    %350 = vmatpush1.xpose.msra.mxu0 %v347
    %351 = vmatprep.subr.mxu0 0.0
    %352 = vmatpush1.xpose.msra.mxu0 0.0
    %353 = vmatprep.subr.mxu0 0.0
    %354 = vmatpush1.xpose.msra.mxu0 0.0
    %355 = vmatprep.subr.mxu0 0.0
    %356 = vmatpush1.xpose.msra.mxu0 0.0
    %357 = vmatprep.subr.mxu0 0.0
    %358 = vmatpush1.xpose.msra.mxu0 0.0
    %359 = vmatprep.subr.mxu0 0.0
    %360 = vmatpush1.xpose.msra.mxu0 0.0
    %361 = vmatprep.subr.mxu0 0.0
    %362 = vmatpush1.xpose.msra.mxu0 0.0
    %363 = vmatprep.subr.mxu0 0.0
    %364 = vmatpush1.xpose.msra.mxu0 0.0
    %365 = vmatprep.subr.mxu0 0.0
    %366 = vmatpush1.xpose.msra.mxu0 0.0
    %367 = vmatprep.subr.mxu0 0.0
    %368 = vmatpush1.xpose.msra.mxu0 0.0
    %369 = vmatprep.subr.mxu0 0.0
    %370 = vmatpush1.xpose.msra.mxu0 0.0
    %371 = vmatprep.subr.mxu0 0.0
    %372 = vmatpush1.xpose.msra.mxu0 0.0
    %373 = vmatprep.subr.mxu0 0.0
    %374 = vmatpush1.xpose.msra.mxu0 0.0
    %375 = vmatprep.subr.mxu0 0.0
    %376 = vmatpush1.xpose.msra.mxu0 0.0
    %377 = vmatprep.subr.mxu0 0.0
    %378 = vmatpush1.xpose.msra.mxu0 0.0
    %379 = vmatprep.subr.mxu0 0.0
    %380 = vmatpush1.xpose.msra.mxu0 0.0
    %381 = vmatprep.subr.mxu0 0.0
    %382 = vmatpush1.xpose.msra.mxu0 0.0
    %383 = vmatprep.subr.mxu0 0.0
    %384 = vmatpush1.xpose.msra.mxu0 0.0
    %385 = vmatprep.subr.mxu0 0.0
    %386 = vmatpush1.xpose.msra.mxu0 0.0
    %387 = vmatprep.subr.mxu0 0.0
    %388 = vmatpush1.xpose.msra.mxu0 0.0
    %389 = vmatprep.subr.mxu0 0.0
    %390 = vmatpush1.xpose.msra.mxu0 0.0
    %391 = vmatprep.subr.mxu0 0.0
    %392 = vmatpush1.xpose.msra.mxu0 0.0
    %393 = vmatprep.subr.mxu0 0.0
    %394 = vmatpush1.xpose.msra.mxu0 0.0
    %395 = vmatprep.subr.mxu0 0.0
    %396 = vmatpush1.xpose.msra.mxu0 0.0
    %397 = vmatprep.subr.mxu0 0.0
    %398 = vmatpush1.xpose.msra.mxu0 0.0
    %399 = vmatprep.subr.mxu0 0.0
    %400 = vmatpush1.xpose.msra.mxu0 0.0
    %401 = vmatprep.subr.mxu0 0.0
    %402 = vmatpush1.xpose.msra.mxu0 0.0
    %403 = vmatprep.subr.mxu0 0.0
    %404 = vmatpush1.xpose.msra.mxu0 0.0
    %405 = vmatprep.subr.mxu0 0.0
    %406 = vmatpush1.xpose.msra.mxu0 0.0
    %407 = vmatprep.subr.mxu0 0.0
    %408 = vmatpush1.xpose.msra.mxu0 0.0
    %409 = vmatprep.subr.mxu0 0.0
    %410 = vmatpush1.xpose.msra.mxu0 0.0
    %411 = vmatprep.subr.mxu0 0.0
    %412 = vmatpush1.xpose.msra.mxu0 0.0
    %413 = vmatprep.mubr.f32.mxu0 0.0
    %414 = vmatmul.mubr.f32.gmra.mrb[0].mxu0 %v344
    %v415 = vpop.f32.mrb[0].mxu0
    %v416 = vadd.f32 %v341, %v415
    %v417 = vpop.f32.mrb[0].mxu0
    %418 = vdwg.mxu0
    %vm419 = vcmask 58368
    %420 = vst.msk [vmem:[#allocation10] sm:$0x3] %vm419, %v416
    // Predicated region
    $region54: #{tpu_custom_call.1} parent=1 // pred_check
      _
    $region55: #{tpu_custom_call.1} parent=1 // pred_check_branch
      %422 = sbr.rel (0) target = $region57
    $region56: #{tpu_custom_call.1} parent=1 // pred_region
      %s424 = ssub.s32 32, 32
      %425 = vsyncadd [#allocation4], %s424
      %s427 = sshll.u32 [#allocation10], 4
      %s428 = int_to_ptr.vmem [resolvable:$true] %s427
      %430 = dma.vmem_to_hbm [thread:$0]  %s428, 32, %s9, [#allocation4]
    $region57: #{tpu_custom_call.1} parent=1 // pred_fallthru
      _
    // Predicated region
    $region58: #{tpu_custom_call.1} parent=1 // pred_check
      _
    $region59: #{tpu_custom_call.1} parent=1 // pred_check_branch
      %432 = sbr.rel (0) target = $region61
    $region60: #{tpu_custom_call.1} parent=1 // pred_region
      %433 = dma.done [#allocation4], 32
    $region61: #{tpu_custom_call.1} parent=1 // pred_fallthru
      _
    %434 = vsyncpa [#allocation3], 1
    %435 = vsyncpa [#allocation6], 1
    %436 = vsyncpa [#allocation9], 1
    %437 = vsyncpa [#allocation4], 1

</llo_original>
